<compile_context>
chip_gen: v7x
topology: tpu7x:2x2x1
jax: 0.10.0
libtpu: 0.0.40
codegen_flags: <defaults>
</compile_context>

<pallas_src>
import jax
import jax.numpy as jnp
from jax import lax
from jax.experimental import pallas as pl
from jax.experimental.pallas import tpu as pltpu


def _round_up(x, m):
    return ((x + m - 1) // m) * m


def _pick_tile(total, candidates, prefer_multiple_blocks=True):
    """Largest candidate dividing `total`; prefer >=2 blocks (megacore)."""
    if prefer_multiple_blocks:
        for c in candidates:
            if total % c == 0 and total // c >= 2:
                return c
    for c in candidates:
        if total % c == 0:
            return c
    return total


def _fused_gemm_kernel(wt_ref, xt_ref, b_ref, o_ref):
    # wt_ref: (t_n, Cin)  xt_ref: (Cin, t_m)  b_ref: (t_n, 1)  o_ref: (t_n, t_m)
    acc = jnp.dot(
        wt_ref[...],
        xt_ref[...],
        preferred_element_type=jnp.float32,
        precision=lax.Precision.HIGHEST,   # fp32 parity with PyTorch conv
    )
    o_ref[...] = acc + b_ref[...]          # bias broadcast along lanes


def _deconv_gemm(wt, xt, bias_rows, t_n, t_m):
    """Y[Nout_pad, M_pad] = wt @ xt + bias_rows, lane-dense output (M on lanes)."""
    Nout_pad, Cin = wt.shape
    _, M_pad = xt.shape
    grid = (Nout_pad // t_n, M_pad // t_m)

    # Explicit VMEM budget (double-buffered pipeline), capped for v7x (64 MiB).
    step_bytes = 4 * (t_n * Cin + Cin * t_m + t_n + t_n * t_m)
    vmem_limit = int(min(max(4 * step_bytes, 32 * 1024 * 1024), 48 * 1024 * 1024))

    return pl.pallas_call(
        _fused_gemm_kernel,
        out_shape=jax.ShapeDtypeStruct((Nout_pad, M_pad), jnp.float32),
        grid_spec=pltpu.PrefetchScalarGridSpec(
            num_scalar_prefetch=0,
            grid=grid,
            in_specs=[
                pl.BlockSpec((t_n, Cin), lambda i, j: (i, 0)),   # weight: resident over j
                pl.BlockSpec((Cin, t_m), lambda i, j: (0, j)),   # activations
                pl.BlockSpec((t_n, 1), lambda i, j: (i, 0)),     # per-row bias
            ],
            out_specs=pl.BlockSpec((t_n, t_m), lambda i, j: (i, j)),
        ),
        compiler_params=pltpu.CompilerParams(
            dimension_semantics=("parallel", "parallel"),
            vmem_limit_bytes=vmem_limit,
        ),
    )(wt, xt, bias_rows)


def conv_transpose2d(x, weight, bias, stride):
    """ConvTranspose2d forward (padding=0, dilation=1, output_padding=0).

    x:      (N, Cin, H, W)        NCHW
    weight: (Cin, Cout, kH, kW)   PyTorch ConvTranspose2d layout
    bias:   (Cout,)
    """
    N, Cin, H, W = x.shape
    Cin_w, Cout, kH, kW = weight.shape
    assert Cin == Cin_w
    s = int(stride)

    Hout = (H - 1) * s + kH
    Wout = (W - 1) * s + kW

    M = N * H * W
    Nout = Cout * kH * kW

    # ---- tile selection ------------------------------------------------------
    M_pad = _round_up(M, 128)
    t_m = _pick_tile(M_pad, (1024, 512, 256, 128))
    if Nout <= 512:
        Nout_pad = _round_up(Nout, 8)
        t_n = Nout_pad
    else:
        t_n = 256
        Nout_pad = _round_up(Nout, t_n)

    # ---- operand layouts (tiny compared with the output) ---------------------
    # weight (Cin, Cout, kH, kW) -> rows ordered (kh, kw, co): (Nout, Cin)
    wt = jnp.transpose(weight, (2, 3, 1, 0)).reshape(Nout, Cin).astype(jnp.float32)
    if Nout_pad != Nout:
        wt = jnp.pad(wt, ((0, Nout_pad - Nout), (0, 0)))

    # x NCHW -> (Cin, N*H*W): M lands on the lane axis -> lane-dense stores.
    xt = jnp.transpose(x, (1, 0, 2, 3)).reshape(Cin, M).astype(jnp.float32)
    if M_pad != M:
        xt = jnp.pad(xt, ((0, 0), (0, M_pad - M)))

    exact_tiling = (kH == s) and (kW == s)   # every output element hit exactly once
    non_overlap = (kH <= s) and (kW <= s)

    if exact_tiling:
        b_rows = jnp.tile(bias.astype(jnp.float32), kH * kW)   # fused in-kernel
    else:
        b_rows = jnp.zeros((Nout,), jnp.float32)               # bias added in epilogue
    if Nout_pad != Nout:
        b_rows = jnp.pad(b_rows, (0, Nout_pad - Nout))
    b_rows = b_rows.reshape(Nout_pad, 1)

    # ---- fused GEMM(+bias) on the MXU ----------------------------------------
    y = _deconv_gemm(wt, xt, b_rows, t_n, t_m)[:Nout, :M]
    y = y.reshape(kH, kW, Cout, N, H, W)

    if non_overlap:
        # stride >= kernel: output positions are disjoint -> pure layout epilogue,
        # zero scatter-adds (XLA fuses bias/slice into the final transpose).
        if kH < s or kW < s:
            y = jnp.pad(y, ((0, s - kH), (0, s - kW)) + ((0, 0),) * 4)
        out = jnp.transpose(y, (3, 2, 4, 0, 5, 1))        # (N, Cout, H, s, W, s)
        out = out.reshape(N, Cout, H * s, W * s)[:, :, :Hout, :Wout]
        if not exact_tiling:
            out = out + bias.astype(jnp.float32)[None, :, None, None]
        return out

    # General overlapping case (kernel > stride): strided adds per (kh, kw).
    y = jnp.transpose(y, (0, 1, 3, 2, 4, 5))              # (kH, kW, N, Cout, H, W)
    out = jnp.broadcast_to(
        bias.astype(jnp.float32)[None, :, None, None], (N, Cout, Hout, Wout))
    for kh in range(kH):
        for kw in range(kW):
            out = out.at[:, :, kh: kh + (H - 1) * s + 1: s,
                               kw: kw + (W - 1) * s + 1: s].add(y[kh, kw])
    return out


class UpSample:
    """JAX/Pallas equivalent of the PyTorch UpSample module (ConvTranspose2d)."""

    def __init__(self, input_dim, output_dim, kernel_size, stride, key):
        self.stride = stride
        k_w, k_b = jax.random.split(key)
        # Mimic PyTorch's uniform(-1/sqrt(fan), 1/sqrt(fan)) init.
        fan = input_dim * kernel_size * kernel_size
        bound = 1.0 / (fan ** 0.5)
        self.weight = jax.random.uniform(
            k_w, (input_dim, output_dim, kernel_size, kernel_size),
            minval=-bound, maxval=bound, dtype=jnp.float32)
        self.bias = jax.random.uniform(
            k_b, (output_dim,), minval=-bound, maxval=bound, dtype=jnp.float32)

    def __call__(self, x):
        return conv_transpose2d(x, self.weight, self.bias, self.stride)


def _ref_conv_transpose2d(x, weight, bias, stride):
    """Pure-JAX reference (direct ConvTranspose2d formula)."""
    N, Cin, H, W = x.shape
    _, Cout, kH, kW = weight.shape
    s = int(stride)
    Hout = (H - 1) * s + kH
    Wout = (W - 1) * s + kW
    y = jnp.einsum('nchw,cokl->nohwkl', x, weight,
                   precision=lax.Precision.HIGHEST)       # (N,Cout,H,W,kH,kW)
    out = jnp.broadcast_to(bias[None, :, None, None], (N, Cout, Hout, Wout))
    for kh in range(kH):
        for kw in range(kW):
            out = out.at[:, :, kh: kh + (H - 1) * s + 1: s,
                               kw: kw + (W - 1) * s + 1: s].add(y[..., kh, kw])
    return out


if __name__ == "__main__":
    key = jax.random.PRNGKey(0)
    k_x, k_p = jax.random.split(key)

    # Small, module-consistent shapes.
    N, Cin, H, W = 2, 4, 16, 16
    Cout, ksize, stride = 8, 2, 2

    x = jax.random.normal(k_x, (N, Cin, H, W), dtype=jnp.float32)  # NCHW

    model = UpSample(Cin, Cout, ksize, stride, k_p)

    fwd = jax.jit(model.__call__)
    out = fwd(x)
    jax.block_until_ready(out)

    expected_shape = (N, Cout, (H - 1) * stride + ksize, (W - 1) * stride + ksize)
    assert out.shape == expected_shape, (out.shape, expected_shape)

    # Correctness against a pure-JAX reference.
    ref = _ref_conv_transpose2d(x, model.weight, model.bias, stride)
    max_err = float(jnp.max(jnp.abs(out - ref)))
    assert max_err < 1e-4, f"max abs error {max_err}"

    print("KERNEL_OK")
</pallas_src>

<mosaic_0001>
module attributes {stable_mosaic.version = 11 : i64} {
  func.func @_fused_gemm_kernel(%arg0: i32, %arg1: i32, %arg2: memref<32x4xf32, #tpu.memory_space<vmem>>, %arg3: memref<4x256xf32, #tpu.memory_space<vmem>>, %arg4: memref<32x1xf32, #tpu.memory_space<vmem>>, %arg5: memref<32x256xf32, #tpu.memory_space<vmem>>) attributes {dimension_semantics = [#tpu.dimension_semantics<parallel>, #tpu.dimension_semantics<parallel>], iteration_bounds = array<i64: 1, 2>, scalar_prefetch = 0 : i64, scratch_operands = 0 : i64, tpu.core_type = #tpu.core_type<tc>, window_params = [{transform_indices = @transform_0, window_bounds = array<i64: 32, 4>}, {transform_indices = @transform_1, window_bounds = array<i64: 4, 256>}, {transform_indices = @transform_2, window_bounds = array<i64: 32, 1>}, {transform_indices = @transform_3, window_bounds = array<i64: 32, 256>}]} {
    %c0 = arith.constant 0 : index
    %c0_0 = arith.constant 0 : index
    %0 = vector.load %arg2[%c0, %c0_0] : memref<32x4xf32, #tpu.memory_space<vmem>>, vector<32x4xf32>
    %c0_1 = arith.constant 0 : index
    %c0_2 = arith.constant 0 : index
    %1 = vector.load %arg3[%c0_1, %c0_2] : memref<4x256xf32, #tpu.memory_space<vmem>>, vector<4x256xf32>
    %cst = arith.constant dense<0.000000e+00> : vector<32x256xf32>
    %2 = tpu.matmul %0, %1, %cst {dimension_numbers = #tpu.dot_dimension_numbers<[1], [0], [0], [1], [0, 0, 1, 1], [], []>, precision = #tpu.contract_precision<fp32>} : vector<32x4xf32>, vector<4x256xf32>, vector<32x256xf32> -> vector<32x256xf32>
    %c0_3 = arith.constant 0 : index
    %c0_4 = arith.constant 0 : index
    %3 = vector.load %arg4[%c0_3, %c0_4] : memref<32x1xf32, #tpu.memory_space<vmem>>, vector<32x1xf32>
    %4 = vector.broadcast %3 : vector<32x1xf32> to vector<32x256xf32>
    %5 = arith.addf %2, %4 : vector<32x256xf32>
    %c0_5 = arith.constant 0 : index
    %c0_6 = arith.constant 0 : index
    %6 = vector.load %arg5[%c0_5, %c0_6] : memref<32x256xf32, #tpu.memory_space<vmem>>, vector<32x256xf32>
    tpu.vector_store %arg5[%c0_5, %c0_6], %5 {strides = array<i32>} : memref<32x256xf32, #tpu.memory_space<vmem>>, vector<32x256xf32>,
    return
  }
  func.func @transform_0(%arg0: i32, %arg1: i32) -> (i32, i32) {
    %c0_i32 = arith.constant 0 : i32
    %c0_i32_0 = arith.constant 0 : i32
    return %arg0, %c0_i32 : i32, i32
  }
  func.func @transform_1(%arg0: i32, %arg1: i32) -> (i32, i32) {
    %c0_i32 = arith.constant 0 : i32
    %c0_i32_0 = arith.constant 0 : i32
    return %c0_i32, %arg1 : i32, i32
  }
  func.func @transform_2(%arg0: i32, %arg1: i32) -> (i32, i32) {
    %c0_i32 = arith.constant 0 : i32
    %c0_i32_0 = arith.constant 0 : i32
    return %arg0, %c0_i32 : i32, i32
  }
  func.func @transform_3(%arg0: i32, %arg1: i32) -> (i32, i32) {
    %c0_i32 = arith.constant 0 : i32
    return %arg0, %arg1 : i32, i32
  }
}

</mosaic_0001>

<llo_original>
// kernel: tile.6
$region0: #{tile.6}
  #allocation0 [shape = 's32[1]{0}', space=sflag, size = 0x4, scoped, tag = 'scoped memory for tile.6']
  %s0 = inlined_call_operand.vmem [shape: f32[8], index: 0, kind: input, shape index: {}]
  %s1 = inlined_call_operand.vmem [shape: f32[4,8], index: 1, kind: output, shape index: {}]
  // Predicated region
  $region2: #{tile.6} parent=0 // pred_check
    _
  $region3: #{tile.6} parent=0 // pred_check_branch
    %3 = sbr.rel (0) target = $region5
  $region4: #{tile.6} parent=0 // pred_region
    _
  $region5: #{tile.6} parent=0 // pred_fallthru
    _
  %v4 = vld [vmem:[%s0] ss:$0 sm:$0xff]
  %5 = vst [vmem:[%s1] sm:$0xf] %v4

// kernel: tile.0
$region0: #{tile.0}
  %s0 = inlined_call_operand.vmem [shape: f32[4,8], index: 0, kind: input, shape index: {}]
  %s1 = inlined_call_operand.vmem [shape: f32[32,1], index: 1, kind: output, shape index: {}]
  $region1: #{tile.0} parent=0
    #allocation0 [shape = 'u8[4096]{0}', space=vmem, size = 0x1000, scoped, tag = 'scoped mem for input reshape']
    %s3 = sshllo.u32 0, 4
    %v4 = vld [vmem:[%s0] sm:%s3]
    %5 = vst [vmem:[#allocation0] sm:%s3] %v4
    %v6 = vld [vmem:[#allocation0] sm:$0xf]
    %vm7 = vcmask 7168
    %8 = vst.msk [vmem:[%s1] ss:$8 sm:$0xf] %vm7, %v6
    %v9 = vld [vmem:[#allocation0] sm:$0xf]
    %10 = vrot.lane.b32.xlu0 %v9, 127
    %v11 = vpop.permute.xlu0 %10
    %vm12 = vcmask 7168
    %s13 = scalar_lea.vmem %s1, 1
    %14 = vst.msk [vmem:[%s13] ss:$8 sm:$0xf] %vm12, %v11
    %v15 = vld [vmem:[#allocation0] sm:$0xf]
    %16 = vrot.lane.b32.xlu0 %v15, 126
    %v17 = vpop.permute.xlu0 %16
    %vm18 = vcmask 7168
    %s19 = scalar_lea.vmem %s1, 2
    %20 = vst.msk [vmem:[%s19] ss:$8 sm:$0xf] %vm18, %v17
    %v21 = vld [vmem:[#allocation0] sm:$0xf]
    %22 = vrot.lane.b32.xlu0 %v21, 125
    %v23 = vpop.permute.xlu0 %22
    %vm24 = vcmask 7168
    %s25 = scalar_lea.vmem %s1, 3
    %26 = vst.msk [vmem:[%s25] ss:$8 sm:$0xf] %vm24, %v23
    %v27 = vld [vmem:[#allocation0] sm:$0xf]
    %28 = vrot.lane.b32.xlu0 %v27, 124
    %v29 = vpop.permute.xlu0 %28
    %vm30 = vcmask 7168
    %s31 = scalar_lea.vmem %s1, 4
    %32 = vst.msk [vmem:[%s31] ss:$8 sm:$0xf] %vm30, %v29
    %v33 = vld [vmem:[#allocation0] sm:$0xf]
    %34 = vrot.lane.b32.xlu0 %v33, 123
    %v35 = vpop.permute.xlu0 %34
    %vm36 = vcmask 7168
    %s37 = scalar_lea.vmem %s1, 5
    %38 = vst.msk [vmem:[%s37] ss:$8 sm:$0xf] %vm36, %v35
    %v39 = vld [vmem:[#allocation0] sm:$0xf]
    %40 = vrot.lane.b32.xlu0 %v39, 122
    %v41 = vpop.permute.xlu0 %40
    %vm42 = vcmask 7168
    %s43 = scalar_lea.vmem %s1, 6
    %44 = vst.msk [vmem:[%s43] ss:$8 sm:$0xf] %vm42, %v41
    %v45 = vld [vmem:[#allocation0] sm:$0xf]
    %46 = vrot.lane.b32.xlu0 %v45, 121
    %v47 = vpop.permute.xlu0 %46
    %vm48 = vcmask 7168
    %s49 = scalar_lea.vmem %s1, 7
    %50 = vst.msk [vmem:[%s49] ss:$8 sm:$0xf] %vm48, %v47

// kernel: a_call__.1
$region0: #{a_call__.1}
  #allocation0 [shape = 'u32[]', space=smem, size = 0x4, offset = 0x4, fixed_abs, tag = 'smem constant byte address 0x4 - core index']
  #allocation1 [shape = 'u32[144,128]{1,0:T(1,128)}', space=vmem, size = 0x12000, scoped, tag = 'internal scratch']
  %s0 = inlined_call_operand.vmem [shape: f32[32,4], index: 0, kind: input, shape index: {}]
  %s1 = inlined_call_operand.vmem [shape: f32[4,512], index: 1, kind: input, shape index: {}]
  %s2 = inlined_call_operand.vmem [shape: f32[32,1], index: 2, kind: input, shape index: {}]
  %s3 = inlined_call_operand.vmem [shape: f32[32,512], index: 3, kind: output, shape index: {}]
  %s4 = sld [smem:[#allocation0]]
  $region64: #{a_call__.1} parent=0
    _
  %s6 = ssub.s32 1, %s4
  %s7 = scalar_select 0, %s6, %s4
  $region1: #{a_call__.1} parent=0
    #allocation2 [shape = 'u8[65536]{0}', space=vmem, size = 0x10000, scoped, tag = 'output window, operand 0']
    loop: start=0, step=1, limit=4
    $region2: #{a_call__.1} parent=1 // loop_pre_header
      _
    $region3: #{a_call__.1} parent=1 // loop_header
      %s9 = sphi 0, %s13
      %p10 = scmp.ge.s32.totalorder %s9, 4
      %s16 = sphi 0, %s28
      %s17 = sphi 0, %s24
      %s18 = sphi 0, %s16
      %s19 = sphi 0, %s17
      %s20 = sphi 0, %s18
      %s21 = sphi 0, %s19
      %s31 = sphi 0, %s33
      %s34 = sphi 0, %s31
      %s35 = sphi 0, %s34
      %s51 = sphi 0, %s35
      %s57 = sphi 0, %s59
      %s60 = sphi 0, %s57
      %s61 = sphi 0, %s60
      %s77 = sphi 0, %s61
      %s83 = sphi 0, %s85
      %s86 = sphi 0, %s83
      %s87 = sphi 0, %s86
      %s103 = sphi 0, %s87
      %s111 = sphi 0, %s113
      %s114 = sphi 0, %s111
      %s115 = sphi 0, %s114
      %s131 = sphi 0, %s115
    $region4: #{a_call__.1} parent=1 // loop_header_branch
      %12 = sbr.rel (%p10) target = $region8
    $region5: #{a_call__.1} parent=1 // loop_body
      %s14 = ssub.s32 %s9, 1
      %s15 = ssub.s32 %s9, 2
      %s22 = sadd.s32 1, %s17
      %p23 = scmp.ge.s32.totalorder %s22, 2
      %s24 = scalar_select %p23, 0, %s22
      %s25 = sadd.s32 1, %s16
      %s26 = scalar_select %p23, %s25, %s16
      %p27 = scmp.ge.s32.totalorder %s26, 1
      %s28 = scalar_select %p27, 0, %s26
      %s29 = ssub.s32 %s16, %s28
      %p30 = scmp.eq.s32.totalorder %s29, 0
      %s32 = sadd.s32 %s31, 1
      %s33 = scalar_select %p30, %s31, %s32
      %p36 = pneg %p30
      %p37 = scmp.eq.s32.totalorder %s9, 1
      %p38 = por %p36, %p37
      %p39 = scmp.ne.s32.totalorder %s31, %s34
      %p40 = scmp.eq.s32.totalorder %s9, 0
      %p41 = por %p39, %p40
      %p42 = scmp.ne.s32.totalorder %s31, %s34
      %p43 = scmp.eq.s32.totalorder %s14, 1
      %p44 = por %p42, %p43
      %p45 = scmp.ne.s32.totalorder %s34, %s35
      %p46 = scmp.eq.s32.totalorder %s14, 0
      %p47 = por %p45, %p46
      %p48 = scmp.ne.s32.totalorder %s34, %s35
      %p49 = scmp.eq.s32.totalorder %s15, 1
      %p50 = por %p48, %p49
      %p52 = scmp.ne.s32.totalorder %s35, %s51
      %p53 = scmp.eq.s32.totalorder %s15, 0
      %p54 = por %p52, %p53
      %s55 = ssub.s32 %s17, %s24
      %p56 = scmp.eq.s32.totalorder %s55, 0
      %s58 = sadd.s32 %s57, 1
      %s59 = scalar_select %p56, %s57, %s58
      %p62 = pneg %p56
      %p63 = scmp.eq.s32.totalorder %s9, 1
      %p64 = por %p62, %p63
      %p65 = scmp.ne.s32.totalorder %s57, %s60
      %p66 = scmp.eq.s32.totalorder %s9, 0
      %p67 = por %p65, %p66
      %p68 = scmp.ne.s32.totalorder %s57, %s60
      %p69 = scmp.eq.s32.totalorder %s14, 1
      %p70 = por %p68, %p69
      %p71 = scmp.ne.s32.totalorder %s60, %s61
      %p72 = scmp.eq.s32.totalorder %s14, 0
      %p73 = por %p71, %p72
      %p74 = scmp.ne.s32.totalorder %s60, %s61
      %p75 = scmp.eq.s32.totalorder %s15, 1
      %p76 = por %p74, %p75
      %p78 = scmp.ne.s32.totalorder %s61, %s77
      %p79 = scmp.eq.s32.totalorder %s15, 0
      %p80 = por %p78, %p79
      %s81 = ssub.s32 %s16, %s28
      %p82 = scmp.eq.s32.totalorder %s81, 0
      %s84 = sadd.s32 %s83, 1
      %s85 = scalar_select %p82, %s83, %s84
      %p88 = pneg %p82
      %p89 = scmp.eq.s32.totalorder %s9, 1
      %p90 = por %p88, %p89
      %p91 = scmp.ne.s32.totalorder %s83, %s86
      %p92 = scmp.eq.s32.totalorder %s9, 0
      %p93 = por %p91, %p92
      %p94 = scmp.ne.s32.totalorder %s83, %s86
      %p95 = scmp.eq.s32.totalorder %s14, 1
      %p96 = por %p94, %p95
      %p97 = scmp.ne.s32.totalorder %s86, %s87
      %p98 = scmp.eq.s32.totalorder %s14, 0
      %p99 = por %p97, %p98
      %p100 = scmp.ne.s32.totalorder %s86, %s87
      %p101 = scmp.eq.s32.totalorder %s15, 1
      %p102 = por %p100, %p101
      %p104 = scmp.ne.s32.totalorder %s87, %s103
      %p105 = scmp.eq.s32.totalorder %s15, 0
      %p106 = por %p104, %p105
      %s107 = ssub.s32 %s16, %s28
      %s108 = ssub.s32 %s17, %s24
      %s109 = sor.u32 %s107, %s108
      %p110 = scmp.eq.s32.totalorder %s109, 0
      %s112 = sadd.s32 %s111, 1
      %s113 = scalar_select %p110, %s111, %s112
      %p116 = pneg %p110
      %p117 = scmp.eq.s32.totalorder %s9, 1
      %p118 = por %p116, %p117
      %p119 = scmp.ne.s32.totalorder %s111, %s114
      %p120 = scmp.eq.s32.totalorder %s9, 0
      %p121 = por %p119, %p120
      %p122 = scmp.ne.s32.totalorder %s111, %s114
      %p123 = scmp.eq.s32.totalorder %s14, 1
      %p124 = por %p122, %p123
      %p125 = scmp.ne.s32.totalorder %s114, %s115
      %p126 = scmp.eq.s32.totalorder %s14, 0
      %p127 = por %p125, %p126
      %p128 = scmp.ne.s32.totalorder %s114, %s115
      %p129 = scmp.eq.s32.totalorder %s15, 1
      %p130 = por %p128, %p129
      %p132 = scmp.ne.s32.totalorder %s115, %s131
      %p133 = scmp.eq.s32.totalorder %s15, 0
      %p134 = por %p132, %p133
      %p135 = scmp.le.s32.totalorder 1, %s9
      %p136 = scmp.lt.s32.totalorder %s9, 3
      %p137 = pnand %p135, %p136
      %p138 = pneg %p137
      // Predicated region
      $region9: #{a_call__.1} parent=5 // pred_check
        _
      $region10: #{a_call__.1} parent=5 // pred_check_branch
        %140 = sbr.rel (%p137) target = $region12
      $region11: #{a_call__.1} parent=5 // pred_region
        %s141 = ssub.s32 %s9, 1
        // Predicated region
        $region13: #{a_call__.1} parent=11 // pred_check
          %p142 = pneg %p47
        $region14: #{a_call__.1} parent=11 // pred_check_branch
          %144 = sbr.rel (%p142) target = $region16
        $region15: #{a_call__.1} parent=11 // pred_region
          %s145 = smul.u32 4, %s18
          %p146 = scmp.lt.s32.totalorder %s145, 3
          %s147 = scalar_select %p146, %s145, 3
          %s148 = smul.addr %s147, 8
          %s149 = scalar_lea.vmem %s0, %s148
          %s150 = smul.u32 4, %s18
        $region16: #{a_call__.1} parent=11 // pred_fallthru
          _
        // Predicated region
        $region17: #{a_call__.1} parent=11 // pred_check
          %p151 = pneg %p99
        $region18: #{a_call__.1} parent=11 // pred_check_branch
          %153 = sbr.rel (%p151) target = $region20
        $region19: #{a_call__.1} parent=11 // pred_region
          %s154 = smul.u32 4, %s18
          %p155 = scmp.lt.s32.totalorder %s154, 3
          %s156 = scalar_select %p155, %s154, 3
          %s157 = smul.addr %s156, 8
          %s158 = scalar_lea.vmem %s2, %s157
          %s159 = smul.u32 4, %s18
        $region20: #{a_call__.1} parent=11 // pred_fallthru
          _
      $region12: #{a_call__.1} parent=5 // pred_fallthru
        _
      %p160 = scmp.lt.s32.totalorder %s9, 2
      // Predicated region
      $region21: #{a_call__.1} parent=5 // pred_check
        %p161 = pneg %p160
      $region22: #{a_call__.1} parent=5 // pred_check_branch
        %163 = sbr.rel (%p161) target = $region24
      $region23: #{a_call__.1} parent=5 // pred_region
        // Predicated region
        $region25: #{a_call__.1} parent=23 // pred_check
          %p164 = pneg %p67
        $region26: #{a_call__.1} parent=23 // pred_check_branch
          %166 = sbr.rel (%p164) target = $region28
        $region27: #{a_call__.1} parent=23 // pred_region
          %s167 = smul.u32 2, %s17
          %p168 = scmp.lt.s32.totalorder %s167, 3
          %s169 = scalar_select %p168, %s167, 3
          %s170 = smul.addr %s169, 4
          %s171 = scalar_lea.vmem %s1, %s170
          %s172 = smul.u32 2, %s17
        $region28: #{a_call__.1} parent=23 // pred_fallthru
          _
      $region24: #{a_call__.1} parent=5 // pred_fallthru
        _
      %p173 = scmp.le.s32.totalorder 1, %s9
      %p174 = scmp.lt.s32.totalorder %s9, 3
      %p175 = pnand %p173, %p174
      %p176 = pneg %p175
      // Predicated region
      $region29: #{a_call__.1} parent=5 // pred_check
        _
      $region30: #{a_call__.1} parent=5 // pred_check_branch
        %178 = sbr.rel (%p175) target = $region32
      $region31: #{a_call__.1} parent=5 // pred_region
        %s179 = ssub.s32 %s9, 1
        %s180 = smul.u32 4, %s18
        %p181 = scmp.lt.s32.totalorder %s180, 3
        %s182 = scalar_select %p181, %s180, 3
        %s183 = smul.addr %s182, 8
        %s184 = scalar_lea.vmem %s0, %s183
        %p185 = pneg %p47
        %p186 = pneg %p44
        %s187 = smul.u32 2, %s19
        %p188 = scmp.lt.s32.totalorder %s187, 3
        %s189 = scalar_select %p188, %s187, 3
        %s190 = smul.addr %s189, 4
        %s191 = scalar_lea.vmem %s1, %s190
        %p192 = pneg %p73
        %p193 = pneg %p70
        %s194 = smul.u32 4, %s18
        %p195 = scmp.lt.s32.totalorder %s194, 3
        %s196 = scalar_select %p195, %s194, 3
        %s197 = smul.addr %s196, 8
        %s198 = scalar_lea.vmem %s2, %s197
        %p199 = pneg %p99
        %p200 = pneg %p96
        %p201 = pneg %p127
        %p202 = pneg %p124
        %s203 = sand.u32 %s114, 1
        %s204 = sand.u32 %s114, 1
        %s205 = smul.addr %s204, 64
        %s206 = scalar_lea.vmem [#allocation2], %s205
        %s207 = smul.u32 4, %s18
        %p208 = scmp.lt.s32.totalorder %s207, 3
        %s209 = scalar_select %p208, %s207, 3
        %s210 = smul.addr %s209, 8
        %s211 = scalar_lea.vmem %s0, %s210
        %s212 = smul.u32 4, %s18
        %s213 = smul.u32 2, %s19
        %p214 = scmp.lt.s32.totalorder %s213, 3
        %s215 = scalar_select %p214, %s213, 3
        %s216 = smul.addr %s215, 4
        %s217 = scalar_lea.vmem %s1, %s216
        %s218 = smul.u32 2, %s19
        %s219 = smul.u32 4, %s18
        %p220 = scmp.lt.s32.totalorder %s219, 3
        %s221 = scalar_select %p220, %s219, 3
        %s222 = smul.addr %s221, 8
        %s223 = scalar_lea.vmem %s2, %s222
        %s224 = smul.u32 4, %s18
        %s225 = smul.u32 4, %s18
        %s226 = smul.u32 2, %s19
        %v227 = vld [vmem:[%s211] sm:$0xff]
        %v228 = vld [vmem:[%s211 + $0x8] sm:$0xff]
        %v229 = vld [vmem:[%s211 + $0x10] sm:$0xff]
        %v230 = vld [vmem:[%s211 + $0x18] sm:$0xff]
        %v231 = vld [vmem:[%s217] sm:$0xff]
        %v232 = vld [vmem:[%s223] sm:$0xff]
        %v233 = vld [vmem:[%s223 + $0x8] sm:$0xff]
        %v234 = vld [vmem:[%s223 + $0x10] sm:$0xff]
        %v235 = vld [vmem:[%s223 + $0x18] sm:$0xff]
        %237 = vset.pattern.permute.xlu0 0
        %238 = vperm.xlu0 %237, %v232
        %v239 = vpop.permute.xlu0 %238
        %242 = vset.pattern.permute.xlu0 0
        %243 = vperm.xlu0 %242, %v233
        %v244 = vpop.permute.xlu0 %243
        %247 = vset.pattern.permute.xlu0 0
        %248 = vperm.xlu0 %247, %v234
        %v249 = vpop.permute.xlu0 %248
        %252 = vset.pattern.permute.xlu0 0
        %253 = vperm.xlu0 %252, %v235
        %v254 = vpop.permute.xlu0 %253
        %v257 = vcombine.high %v231, %v231
        %vm258 = vcmask 31744
        %v260 = vsel %vm258, %v227, 0
        %v263 = vsel %vm258, %v228, 0
        %v266 = vsel %vm258, %v229, 0
        %v269 = vsel %vm258, %v230, 0
        %vm271 = vcmask 1043456
        %v272 = vsel %vm271, %v231, 0
        %v274 = vsel %vm271, %v257, 0
        %v276 = vand.u32 %v274, 4294901760
        %277 = vmatprep.subr.mxu0 %v276
        %v278 = vand.u32 %v272, 4294901760
        %279 = vmatpush1.msra.mxu0 %v278
        %280 = vmatprep.subr.mxu0 0.0
        %281 = vmatpush1.msra.mxu0 0.0
        %282 = vmatprep.subr.mxu0 0.0
        %283 = vmatpush1.msra.mxu0 0.0
        %284 = vmatprep.subr.mxu0 0.0
        %285 = vmatpush1.msra.mxu0 0.0
        %286 = vmatprep.subr.mxu0 0.0
        %287 = vmatpush1.msra.mxu0 0.0
        %288 = vmatprep.subr.mxu0 0.0
        %289 = vmatpush1.msra.mxu0 0.0
        %290 = vmatprep.subr.mxu0 0.0
        %291 = vmatpush1.msra.mxu0 0.0
        %292 = vmatprep.subr.mxu0 0.0
        %293 = vmatpush1.msra.mxu0 0.0
        %294 = vmatprep.subr.mxu0 0.0
        %295 = vmatpush1.msra.mxu0 0.0
        %296 = vmatprep.subr.mxu0 0.0
        %297 = vmatpush1.msra.mxu0 0.0
        %298 = vmatprep.subr.mxu0 0.0
        %299 = vmatpush1.msra.mxu0 0.0
        %300 = vmatprep.subr.mxu0 0.0
        %301 = vmatpush1.msra.mxu0 0.0
        %302 = vmatprep.subr.mxu0 0.0
        %303 = vmatpush1.msra.mxu0 0.0
        %304 = vmatprep.subr.mxu0 0.0
        %305 = vmatpush1.msra.mxu0 0.0
        %306 = vmatprep.subr.mxu0 0.0
        %307 = vmatpush1.msra.mxu0 0.0
        %308 = vmatprep.subr.mxu0 0.0
        %309 = vmatpush1.msra.mxu0 0.0
        %310 = vmatprep.subr.mxu0 0.0
        %311 = vmatpush1.msra.mxu0 0.0
        %312 = vmatprep.subr.mxu0 0.0
        %313 = vmatpush1.msra.mxu0 0.0
        %314 = vmatprep.subr.mxu0 0.0
        %315 = vmatpush1.msra.mxu0 0.0
        %316 = vmatprep.subr.mxu0 0.0
        %317 = vmatpush1.msra.mxu0 0.0
        %318 = vmatprep.subr.mxu0 0.0
        %319 = vmatpush1.msra.mxu0 0.0
        %320 = vmatprep.subr.mxu0 0.0
        %321 = vmatpush1.msra.mxu0 0.0
        %322 = vmatprep.subr.mxu0 0.0
        %323 = vmatpush1.msra.mxu0 0.0
        %324 = vmatprep.subr.mxu0 0.0
        %325 = vmatpush1.msra.mxu0 0.0
        %326 = vmatprep.subr.mxu0 0.0
        %327 = vmatpush1.msra.mxu0 0.0
        %328 = vmatprep.subr.mxu0 0.0
        %329 = vmatpush1.msra.mxu0 0.0
        %330 = vmatprep.subr.mxu0 0.0
        %331 = vmatpush1.msra.mxu0 0.0
        %332 = vmatprep.subr.mxu0 0.0
        %333 = vmatpush1.msra.mxu0 0.0
        %334 = vmatprep.subr.mxu0 0.0
        %335 = vmatpush1.msra.mxu0 0.0
        %336 = vmatprep.subr.mxu0 0.0
        %337 = vmatpush1.msra.mxu0 0.0
        %338 = vmatprep.subr.mxu0 0.0
        %339 = vmatpush1.msra.mxu0 0.0
        %340 = vmatprep.subr.mxu0 0.0
        %341 = vmatpush1.msra.mxu0 0.0
        %342 = vmatprep.mubr.f32.mxu0 0.0
        %v343 = vand.u32 %v260, 4294901760
        %v344 = vsub.f32 %v260, %v343
        %v345 = vand.u32 %v344, 4294901760
        %v346 = vsub.f32 %v344, %v345
        %v347 = vand.u32 %v346, 4294901760
        %348 = vmatmul.mubr.f32.gmra.mrb[0].mxu0 %v347
        %v349 = vpop.f32.mrb[0].mxu0
        %v350 = vadd.f32 %v239, %v349
        %v351 = vpop.f32.mrb[0].mxu0
        %v352 = vadd.f32 %v239, %v351
        %353 = vmatprep.mubr.f32.mxu0 0.0
        %v354 = vand.u32 %v263, 4294901760
        %v355 = vsub.f32 %v263, %v354
        %v356 = vand.u32 %v355, 4294901760
        %v357 = vsub.f32 %v355, %v356
        %v358 = vand.u32 %v357, 4294901760
        %359 = vmatmul.mubr.f32.gmra.mrb[0].mxu0 %v358
        %v360 = vpop.f32.mrb[0].mxu0
        %v361 = vadd.f32 %v244, %v360
        %v362 = vpop.f32.mrb[0].mxu0
        %v363 = vadd.f32 %v244, %v362
        %364 = vmatprep.mubr.f32.mxu0 0.0
        %v365 = vand.u32 %v266, 4294901760
        %v366 = vsub.f32 %v266, %v365
        %v367 = vand.u32 %v366, 4294901760
        %v368 = vsub.f32 %v366, %v367
        %v369 = vand.u32 %v368, 4294901760
        %370 = vmatmul.mubr.f32.gmra.mrb[0].mxu0 %v369
        %v371 = vpop.f32.mrb[0].mxu0
        %v372 = vadd.f32 %v249, %v371
        %v373 = vpop.f32.mrb[0].mxu0
        %v374 = vadd.f32 %v249, %v373
        %375 = vmatprep.mubr.f32.mxu0 0.0
        %v376 = vand.u32 %v269, 4294901760
        %v377 = vsub.f32 %v269, %v376
        %v378 = vand.u32 %v377, 4294901760
        %v379 = vsub.f32 %v377, %v378
        %v380 = vand.u32 %v379, 4294901760
        %381 = vmatmul.mubr.f32.gmra.mrb[0].mxu0 %v380
        %v382 = vpop.f32.mrb[0].mxu0
        %v383 = vadd.f32 %v254, %v382
        %v384 = vpop.f32.mrb[0].mxu0
        %v385 = vadd.f32 %v254, %v384
        %386 = vdwg.mxu0
        %v387 = vand.u32 %v274, 4294901760
        %v388 = vsub.f32 %v274, %v387
        %v389 = vand.u32 %v388, 4294901760
        %v390 = vsub.f32 %v388, %v389
        %v391 = vand.u32 %v390, 4294901760
        %392 = vmatprep.subr.mxu0 %v391
        %v393 = vand.u32 %v272, 4294901760
        %v394 = vsub.f32 %v272, %v393
        %v395 = vand.u32 %v394, 4294901760
        %v396 = vsub.f32 %v394, %v395
        %v397 = vand.u32 %v396, 4294901760
        %398 = vmatpush1.msra.mxu0 %v397
        %399 = vmatprep.subr.mxu0 0.0
        %400 = vmatpush1.msra.mxu0 0.0
        %401 = vmatprep.subr.mxu0 0.0
        %402 = vmatpush1.msra.mxu0 0.0
        %403 = vmatprep.subr.mxu0 0.0
        %404 = vmatpush1.msra.mxu0 0.0
        %405 = vmatprep.subr.mxu0 0.0
        %406 = vmatpush1.msra.mxu0 0.0
        %407 = vmatprep.subr.mxu0 0.0
        %408 = vmatpush1.msra.mxu0 0.0
        %409 = vmatprep.subr.mxu0 0.0
        %410 = vmatpush1.msra.mxu0 0.0
        %411 = vmatprep.subr.mxu0 0.0
        %412 = vmatpush1.msra.mxu0 0.0
        %413 = vmatprep.subr.mxu0 0.0
        %414 = vmatpush1.msra.mxu0 0.0
        %415 = vmatprep.subr.mxu0 0.0
        %416 = vmatpush1.msra.mxu0 0.0
        %417 = vmatprep.subr.mxu0 0.0
        %418 = vmatpush1.msra.mxu0 0.0
        %419 = vmatprep.subr.mxu0 0.0
        %420 = vmatpush1.msra.mxu0 0.0
        %421 = vmatprep.subr.mxu0 0.0
        %422 = vmatpush1.msra.mxu0 0.0
        %423 = vmatprep.subr.mxu0 0.0
        %424 = vmatpush1.msra.mxu0 0.0
        %425 = vmatprep.subr.mxu0 0.0
        %426 = vmatpush1.msra.mxu0 0.0
        %427 = vmatprep.subr.mxu0 0.0
        %428 = vmatpush1.msra.mxu0 0.0
        %429 = vmatprep.subr.mxu0 0.0
        %430 = vmatpush1.msra.mxu0 0.0
        %431 = vmatprep.subr.mxu0 0.0
        %432 = vmatpush1.msra.mxu0 0.0
        %433 = vmatprep.subr.mxu0 0.0
        %434 = vmatpush1.msra.mxu0 0.0
        %435 = vmatprep.subr.mxu0 0.0
        %436 = vmatpush1.msra.mxu0 0.0
        %437 = vmatprep.subr.mxu0 0.0
        %438 = vmatpush1.msra.mxu0 0.0
        %439 = vmatprep.subr.mxu0 0.0
        %440 = vmatpush1.msra.mxu0 0.0
        %441 = vmatprep.subr.mxu0 0.0
        %442 = vmatpush1.msra.mxu0 0.0
        %443 = vmatprep.subr.mxu0 0.0
        %444 = vmatpush1.msra.mxu0 0.0
        %445 = vmatprep.subr.mxu0 0.0
        %446 = vmatpush1.msra.mxu0 0.0
        %447 = vmatprep.subr.mxu0 0.0
        %448 = vmatpush1.msra.mxu0 0.0
        %449 = vmatprep.subr.mxu0 0.0
        %450 = vmatpush1.msra.mxu0 0.0
        %451 = vmatprep.subr.mxu0 0.0
        %452 = vmatpush1.msra.mxu0 0.0
        %453 = vmatprep.subr.mxu0 0.0
        %454 = vmatpush1.msra.mxu0 0.0
        %455 = vmatprep.subr.mxu0 0.0
        %456 = vmatpush1.msra.mxu0 0.0
        %457 = vmatprep.subr.mxu0 0.0
        %458 = vmatpush1.msra.mxu0 0.0
        %459 = vmatprep.subr.mxu0 0.0
        %460 = vmatpush1.msra.mxu0 0.0
        %461 = vmatprep.mubr.f32.mxu0 0.0
        %v462 = vand.u32 %v260, 4294901760
        %463 = vmatmul.mubr.f32.gmra.mrb[0].mxu0 %v462
        %v464 = vpop.f32.mrb[0].mxu0
        %v465 = vadd.f32 %v350, %v464
        %v466 = vpop.f32.mrb[0].mxu0
        %v467 = vadd.f32 %v352, %v466
        %468 = vmatprep.mubr.f32.mxu0 0.0
        %v469 = vand.u32 %v263, 4294901760
        %470 = vmatmul.mubr.f32.gmra.mrb[0].mxu0 %v469
        %v471 = vpop.f32.mrb[0].mxu0
        %v472 = vadd.f32 %v361, %v471
        %v473 = vpop.f32.mrb[0].mxu0
        %v474 = vadd.f32 %v363, %v473
        %475 = vmatprep.mubr.f32.mxu0 0.0
        %v476 = vand.u32 %v266, 4294901760
        %477 = vmatmul.mubr.f32.gmra.mrb[0].mxu0 %v476
        %v478 = vpop.f32.mrb[0].mxu0
        %v479 = vadd.f32 %v372, %v478
        %v480 = vpop.f32.mrb[0].mxu0
        %v481 = vadd.f32 %v374, %v480
        %482 = vmatprep.mubr.f32.mxu0 0.0
        %v483 = vand.u32 %v269, 4294901760
        %484 = vmatmul.mubr.f32.gmra.mrb[0].mxu0 %v483
        %v485 = vpop.f32.mrb[0].mxu0
        %v486 = vadd.f32 %v383, %v485
        %v487 = vpop.f32.mrb[0].mxu0
        %v488 = vadd.f32 %v385, %v487
        %489 = vdwg.mxu0
        %v490 = vand.u32 %v274, 4294901760
        %v491 = vsub.f32 %v274, %v490
        %492 = vmatprep.subr.mxu0 %v491
        %v493 = vand.u32 %v272, 4294901760
        %v494 = vsub.f32 %v272, %v493
        %495 = vmatpush1.msra.mxu0 %v494
        %496 = vmatprep.subr.mxu0 0.0
        %497 = vmatpush1.msra.mxu0 0.0
        %498 = vmatprep.subr.mxu0 0.0
        %499 = vmatpush1.msra.mxu0 0.0
        %500 = vmatprep.subr.mxu0 0.0
        %501 = vmatpush1.msra.mxu0 0.0
        %502 = vmatprep.subr.mxu0 0.0
        %503 = vmatpush1.msra.mxu0 0.0
        %504 = vmatprep.subr.mxu0 0.0
        %505 = vmatpush1.msra.mxu0 0.0
        %506 = vmatprep.subr.mxu0 0.0
        %507 = vmatpush1.msra.mxu0 0.0
        %508 = vmatprep.subr.mxu0 0.0
        %509 = vmatpush1.msra.mxu0 0.0
        %510 = vmatprep.subr.mxu0 0.0
        %511 = vmatpush1.msra.mxu0 0.0
        %512 = vmatprep.subr.mxu0 0.0
        %513 = vmatpush1.msra.mxu0 0.0
        %514 = vmatprep.subr.mxu0 0.0
        %515 = vmatpush1.msra.mxu0 0.0
        %516 = vmatprep.subr.mxu0 0.0
        %517 = vmatpush1.msra.mxu0 0.0
        %518 = vmatprep.subr.mxu0 0.0
        %519 = vmatpush1.msra.mxu0 0.0
        %520 = vmatprep.subr.mxu0 0.0
        %521 = vmatpush1.msra.mxu0 0.0
        %522 = vmatprep.subr.mxu0 0.0
        %523 = vmatpush1.msra.mxu0 0.0
        %524 = vmatprep.subr.mxu0 0.0
        %525 = vmatpush1.msra.mxu0 0.0
        %526 = vmatprep.subr.mxu0 0.0
        %527 = vmatpush1.msra.mxu0 0.0
        %528 = vmatprep.subr.mxu0 0.0
        %529 = vmatpush1.msra.mxu0 0.0
        %530 = vmatprep.subr.mxu0 0.0
        %531 = vmatpush1.msra.mxu0 0.0
        %532 = vmatprep.subr.mxu0 0.0
        %533 = vmatpush1.msra.mxu0 0.0
        %534 = vmatprep.subr.mxu0 0.0
        %535 = vmatpush1.msra.mxu0 0.0
        %536 = vmatprep.subr.mxu0 0.0
        %537 = vmatpush1.msra.mxu0 0.0
        %538 = vmatprep.subr.mxu0 0.0
        %539 = vmatpush1.msra.mxu0 0.0
        %540 = vmatprep.subr.mxu0 0.0
        %541 = vmatpush1.msra.mxu0 0.0
        %542 = vmatprep.subr.mxu0 0.0
        %543 = vmatpush1.msra.mxu0 0.0
        %544 = vmatprep.subr.mxu0 0.0
        %545 = vmatpush1.msra.mxu0 0.0
        %546 = vmatprep.subr.mxu0 0.0
        %547 = vmatpush1.msra.mxu0 0.0
        %548 = vmatprep.subr.mxu0 0.0
        %549 = vmatpush1.msra.mxu0 0.0
        %550 = vmatprep.subr.mxu0 0.0
        %551 = vmatpush1.msra.mxu0 0.0
        %552 = vmatprep.subr.mxu0 0.0
        %553 = vmatpush1.msra.mxu0 0.0
        %554 = vmatprep.subr.mxu0 0.0
        %555 = vmatpush1.msra.mxu0 0.0
        %556 = vmatprep.subr.mxu0 0.0
        %557 = vmatpush1.msra.mxu0 0.0
        %558 = vmatprep.mubr.f32.mxu0 0.0
        %v559 = vand.u32 %v260, 4294901760
        %v560 = vsub.f32 %v260, %v559
        %561 = vmatmul.mubr.f32.gmra.mrb[0].mxu0 %v560
        %v562 = vpop.f32.mrb[0].mxu0
        %v563 = vadd.f32 %v465, %v562
        %v564 = vpop.f32.mrb[0].mxu0
        %v565 = vadd.f32 %v467, %v564
        %566 = vmatprep.mubr.f32.mxu0 0.0
        %v567 = vand.u32 %v263, 4294901760
        %v568 = vsub.f32 %v263, %v567
        %569 = vmatmul.mubr.f32.gmra.mrb[0].mxu0 %v568
        %v570 = vpop.f32.mrb[0].mxu0
        %v571 = vadd.f32 %v472, %v570
        %v572 = vpop.f32.mrb[0].mxu0
        %v573 = vadd.f32 %v474, %v572
        %574 = vmatprep.mubr.f32.mxu0 0.0
        %v575 = vand.u32 %v266, 4294901760
        %v576 = vsub.f32 %v266, %v575
        %577 = vmatmul.mubr.f32.gmra.mrb[0].mxu0 %v576
        %v578 = vpop.f32.mrb[0].mxu0
        %v579 = vadd.f32 %v479, %v578
        %v580 = vpop.f32.mrb[0].mxu0
        %v581 = vadd.f32 %v481, %v580
        %582 = vmatprep.mubr.f32.mxu0 0.0
        %v583 = vand.u32 %v269, 4294901760
        %v584 = vsub.f32 %v269, %v583
        %585 = vmatmul.mubr.f32.gmra.mrb[0].mxu0 %v584
        %v586 = vpop.f32.mrb[0].mxu0
        %v587 = vadd.f32 %v486, %v586
        %v588 = vpop.f32.mrb[0].mxu0
        %v589 = vadd.f32 %v488, %v588
        %590 = vdwg.mxu0
        %v591 = vand.u32 %v274, 4294901760
        %592 = vmatprep.subr.mxu0 %v591
        %v593 = vand.u32 %v272, 4294901760
        %594 = vmatpush1.msra.mxu0 %v593
        %595 = vmatprep.subr.mxu0 0.0
        %596 = vmatpush1.msra.mxu0 0.0
        %597 = vmatprep.subr.mxu0 0.0
        %598 = vmatpush1.msra.mxu0 0.0
        %599 = vmatprep.subr.mxu0 0.0
        %600 = vmatpush1.msra.mxu0 0.0
        %601 = vmatprep.subr.mxu0 0.0
        %602 = vmatpush1.msra.mxu0 0.0
        %603 = vmatprep.subr.mxu0 0.0
        %604 = vmatpush1.msra.mxu0 0.0
        %605 = vmatprep.subr.mxu0 0.0
        %606 = vmatpush1.msra.mxu0 0.0
        %607 = vmatprep.subr.mxu0 0.0
        %608 = vmatpush1.msra.mxu0 0.0
        %609 = vmatprep.subr.mxu0 0.0
        %610 = vmatpush1.msra.mxu0 0.0
        %611 = vmatprep.subr.mxu0 0.0
        %612 = vmatpush1.msra.mxu0 0.0
        %613 = vmatprep.subr.mxu0 0.0
        %614 = vmatpush1.msra.mxu0 0.0
        %615 = vmatprep.subr.mxu0 0.0
        %616 = vmatpush1.msra.mxu0 0.0
        %617 = vmatprep.subr.mxu0 0.0
        %618 = vmatpush1.msra.mxu0 0.0
        %619 = vmatprep.subr.mxu0 0.0
        %620 = vmatpush1.msra.mxu0 0.0
        %621 = vmatprep.subr.mxu0 0.0
        %622 = vmatpush1.msra.mxu0 0.0
        %623 = vmatprep.subr.mxu0 0.0
        %624 = vmatpush1.msra.mxu0 0.0
        %625 = vmatprep.subr.mxu0 0.0
        %626 = vmatpush1.msra.mxu0 0.0
        %627 = vmatprep.subr.mxu0 0.0
        %628 = vmatpush1.msra.mxu0 0.0
        %629 = vmatprep.subr.mxu0 0.0
        %630 = vmatpush1.msra.mxu0 0.0
        %631 = vmatprep.subr.mxu0 0.0
        %632 = vmatpush1.msra.mxu0 0.0
        %633 = vmatprep.subr.mxu0 0.0
        %634 = vmatpush1.msra.mxu0 0.0
        %635 = vmatprep.subr.mxu0 0.0
        %636 = vmatpush1.msra.mxu0 0.0
        %637 = vmatprep.subr.mxu0 0.0
        %638 = vmatpush1.msra.mxu0 0.0
        %639 = vmatprep.subr.mxu0 0.0
        %640 = vmatpush1.msra.mxu0 0.0
        %641 = vmatprep.subr.mxu0 0.0
        %642 = vmatpush1.msra.mxu0 0.0
        %643 = vmatprep.subr.mxu0 0.0
        %644 = vmatpush1.msra.mxu0 0.0
        %645 = vmatprep.subr.mxu0 0.0
        %646 = vmatpush1.msra.mxu0 0.0
        %647 = vmatprep.subr.mxu0 0.0
        %648 = vmatpush1.msra.mxu0 0.0
        %649 = vmatprep.subr.mxu0 0.0
        %650 = vmatpush1.msra.mxu0 0.0
        %651 = vmatprep.subr.mxu0 0.0
        %652 = vmatpush1.msra.mxu0 0.0
        %653 = vmatprep.subr.mxu0 0.0
        %654 = vmatpush1.msra.mxu0 0.0
        %655 = vmatprep.subr.mxu0 0.0
        %656 = vmatpush1.msra.mxu0 0.0
        %657 = vmatprep.mubr.f32.mxu0 0.0
        %v658 = vand.u32 %v260, 4294901760
        %v659 = vsub.f32 %v260, %v658
        %v660 = vand.u32 %v659, 4294901760
        %661 = vmatmul.mubr.f32.gmra.mrb[0].mxu0 %v660
        %v662 = vpop.f32.mrb[0].mxu0
        %v663 = vadd.f32 %v563, %v662
        %v664 = vpop.f32.mrb[0].mxu0
        %v665 = vadd.f32 %v565, %v664
        %666 = vmatprep.mubr.f32.mxu0 0.0
        %v667 = vand.u32 %v263, 4294901760
        %v668 = vsub.f32 %v263, %v667
        %v669 = vand.u32 %v668, 4294901760
        %670 = vmatmul.mubr.f32.gmra.mrb[0].mxu0 %v669
        %v671 = vpop.f32.mrb[0].mxu0
        %v672 = vadd.f32 %v571, %v671
        %v673 = vpop.f32.mrb[0].mxu0
        %v674 = vadd.f32 %v573, %v673
        %675 = vmatprep.mubr.f32.mxu0 0.0
        %v676 = vand.u32 %v266, 4294901760
        %v677 = vsub.f32 %v266, %v676
        %v678 = vand.u32 %v677, 4294901760
        %679 = vmatmul.mubr.f32.gmra.mrb[0].mxu0 %v678
        %v680 = vpop.f32.mrb[0].mxu0
        %v681 = vadd.f32 %v579, %v680
        %v682 = vpop.f32.mrb[0].mxu0
        %v683 = vadd.f32 %v581, %v682
        %684 = vmatprep.mubr.f32.mxu0 0.0
        %v685 = vand.u32 %v269, 4294901760
        %v686 = vsub.f32 %v269, %v685
        %v687 = vand.u32 %v686, 4294901760
        %688 = vmatmul.mubr.f32.gmra.mrb[0].mxu0 %v687
        %v689 = vpop.f32.mrb[0].mxu0
        %v690 = vadd.f32 %v587, %v689
        %v691 = vpop.f32.mrb[0].mxu0
        %v692 = vadd.f32 %v589, %v691
        %693 = vdwg.mxu0
        %v694 = vand.u32 %v274, 4294901760
        %v695 = vsub.f32 %v274, %v694
        %v696 = vand.u32 %v695, 4294901760
        %697 = vmatprep.subr.mxu0 %v696
        %v698 = vand.u32 %v272, 4294901760
        %v699 = vsub.f32 %v272, %v698
        %v700 = vand.u32 %v699, 4294901760
        %701 = vmatpush1.msra.mxu0 %v700
        %702 = vmatprep.subr.mxu0 0.0
        %703 = vmatpush1.msra.mxu0 0.0
        %704 = vmatprep.subr.mxu0 0.0
        %705 = vmatpush1.msra.mxu0 0.0
        %706 = vmatprep.subr.mxu0 0.0
        %707 = vmatpush1.msra.mxu0 0.0
        %708 = vmatprep.subr.mxu0 0.0
        %709 = vmatpush1.msra.mxu0 0.0
        %710 = vmatprep.subr.mxu0 0.0
        %711 = vmatpush1.msra.mxu0 0.0
        %712 = vmatprep.subr.mxu0 0.0
        %713 = vmatpush1.msra.mxu0 0.0
        %714 = vmatprep.subr.mxu0 0.0
        %715 = vmatpush1.msra.mxu0 0.0
        %716 = vmatprep.subr.mxu0 0.0
        %717 = vmatpush1.msra.mxu0 0.0
        %718 = vmatprep.subr.mxu0 0.0
        %719 = vmatpush1.msra.mxu0 0.0
        %720 = vmatprep.subr.mxu0 0.0
        %721 = vmatpush1.msra.mxu0 0.0
        %722 = vmatprep.subr.mxu0 0.0
        %723 = vmatpush1.msra.mxu0 0.0
        %724 = vmatprep.subr.mxu0 0.0
        %725 = vmatpush1.msra.mxu0 0.0
        %726 = vmatprep.subr.mxu0 0.0
        %727 = vmatpush1.msra.mxu0 0.0
        %728 = vmatprep.subr.mxu0 0.0
        %729 = vmatpush1.msra.mxu0 0.0
        %730 = vmatprep.subr.mxu0 0.0
        %731 = vmatpush1.msra.mxu0 0.0
        %732 = vmatprep.subr.mxu0 0.0
        %733 = vmatpush1.msra.mxu0 0.0
        %734 = vmatprep.subr.mxu0 0.0
        %735 = vmatpush1.msra.mxu0 0.0
        %736 = vmatprep.subr.mxu0 0.0
        %737 = vmatpush1.msra.mxu0 0.0
        %738 = vmatprep.subr.mxu0 0.0
        %739 = vmatpush1.msra.mxu0 0.0
        %740 = vmatprep.subr.mxu0 0.0
        %741 = vmatpush1.msra.mxu0 0.0
        %742 = vmatprep.subr.mxu0 0.0
        %743 = vmatpush1.msra.mxu0 0.0
        %744 = vmatprep.subr.mxu0 0.0
        %745 = vmatpush1.msra.mxu0 0.0
        %746 = vmatprep.subr.mxu0 0.0
        %747 = vmatpush1.msra.mxu0 0.0
        %748 = vmatprep.subr.mxu0 0.0
        %749 = vmatpush1.msra.mxu0 0.0
        %750 = vmatprep.subr.mxu0 0.0
        %751 = vmatpush1.msra.mxu0 0.0
        %752 = vmatprep.subr.mxu0 0.0
        %753 = vmatpush1.msra.mxu0 0.0
        %754 = vmatprep.subr.mxu0 0.0
        %755 = vmatpush1.msra.mxu0 0.0
        %756 = vmatprep.subr.mxu0 0.0
        %757 = vmatpush1.msra.mxu0 0.0
        %758 = vmatprep.subr.mxu0 0.0
        %759 = vmatpush1.msra.mxu0 0.0
        %760 = vmatprep.subr.mxu0 0.0
        %761 = vmatpush1.msra.mxu0 0.0
        %762 = vmatprep.subr.mxu0 0.0
        %763 = vmatpush1.msra.mxu0 0.0
        %764 = vmatprep.mubr.f32.mxu0 0.0
        %v765 = vand.u32 %v260, 4294901760
        %766 = vmatmul.mubr.f32.gmra.mrb[0].mxu0 %v765
        %v767 = vpop.f32.mrb[0].mxu0
        %v768 = vadd.f32 %v663, %v767
        %v769 = vpop.f32.mrb[0].mxu0
        %v770 = vadd.f32 %v665, %v769
        %771 = vmatprep.mubr.f32.mxu0 0.0
        %v772 = vand.u32 %v263, 4294901760
        %773 = vmatmul.mubr.f32.gmra.mrb[0].mxu0 %v772
        %v774 = vpop.f32.mrb[0].mxu0
        %v775 = vadd.f32 %v672, %v774
        %v776 = vpop.f32.mrb[0].mxu0
        %v777 = vadd.f32 %v674, %v776
        %778 = vmatprep.mubr.f32.mxu0 0.0
        %v779 = vand.u32 %v266, 4294901760
        %780 = vmatmul.mubr.f32.gmra.mrb[0].mxu0 %v779
        %v781 = vpop.f32.mrb[0].mxu0
        %v782 = vadd.f32 %v681, %v781
        %v783 = vpop.f32.mrb[0].mxu0
        %v784 = vadd.f32 %v683, %v783
        %785 = vmatprep.mubr.f32.mxu0 0.0
        %v786 = vand.u32 %v269, 4294901760
        %787 = vmatmul.mubr.f32.gmra.mrb[0].mxu0 %v786
        %v788 = vpop.f32.mrb[0].mxu0
        %v789 = vadd.f32 %v690, %v788
        %v790 = vpop.f32.mrb[0].mxu0
        %v791 = vadd.f32 %v692, %v790
        %792 = vdwg.mxu0
        %v793 = vand.u32 %v274, 4294901760
        %794 = vmatprep.subr.mxu0 %v793
        %v795 = vand.u32 %v272, 4294901760
        %796 = vmatpush1.msra.mxu0 %v795
        %797 = vmatprep.subr.mxu0 0.0
        %798 = vmatpush1.msra.mxu0 0.0
        %799 = vmatprep.subr.mxu0 0.0
        %800 = vmatpush1.msra.mxu0 0.0
        %801 = vmatprep.subr.mxu0 0.0
        %802 = vmatpush1.msra.mxu0 0.0
        %803 = vmatprep.subr.mxu0 0.0
        %804 = vmatpush1.msra.mxu0 0.0
        %805 = vmatprep.subr.mxu0 0.0
        %806 = vmatpush1.msra.mxu0 0.0
        %807 = vmatprep.subr.mxu0 0.0
        %808 = vmatpush1.msra.mxu0 0.0
        %809 = vmatprep.subr.mxu0 0.0
        %810 = vmatpush1.msra.mxu0 0.0
        %811 = vmatprep.subr.mxu0 0.0
        %812 = vmatpush1.msra.mxu0 0.0
        %813 = vmatprep.subr.mxu0 0.0
        %814 = vmatpush1.msra.mxu0 0.0
        %815 = vmatprep.subr.mxu0 0.0
        %816 = vmatpush1.msra.mxu0 0.0
        %817 = vmatprep.subr.mxu0 0.0
        %818 = vmatpush1.msra.mxu0 0.0
        %819 = vmatprep.subr.mxu0 0.0
        %820 = vmatpush1.msra.mxu0 0.0
        %821 = vmatprep.subr.mxu0 0.0
        %822 = vmatpush1.msra.mxu0 0.0
        %823 = vmatprep.subr.mxu0 0.0
        %824 = vmatpush1.msra.mxu0 0.0
        %825 = vmatprep.subr.mxu0 0.0
        %826 = vmatpush1.msra.mxu0 0.0
        %827 = vmatprep.subr.mxu0 0.0
        %828 = vmatpush1.msra.mxu0 0.0
        %829 = vmatprep.subr.mxu0 0.0
        %830 = vmatpush1.msra.mxu0 0.0
        %831 = vmatprep.subr.mxu0 0.0
        %832 = vmatpush1.msra.mxu0 0.0
        %833 = vmatprep.subr.mxu0 0.0
        %834 = vmatpush1.msra.mxu0 0.0
        %835 = vmatprep.subr.mxu0 0.0
        %836 = vmatpush1.msra.mxu0 0.0
        %837 = vmatprep.subr.mxu0 0.0
        %838 = vmatpush1.msra.mxu0 0.0
        %839 = vmatprep.subr.mxu0 0.0
        %840 = vmatpush1.msra.mxu0 0.0
        %841 = vmatprep.subr.mxu0 0.0
        %842 = vmatpush1.msra.mxu0 0.0
        %843 = vmatprep.subr.mxu0 0.0
        %844 = vmatpush1.msra.mxu0 0.0
        %845 = vmatprep.subr.mxu0 0.0
        %846 = vmatpush1.msra.mxu0 0.0
        %847 = vmatprep.subr.mxu0 0.0
        %848 = vmatpush1.msra.mxu0 0.0
        %849 = vmatprep.subr.mxu0 0.0
        %850 = vmatpush1.msra.mxu0 0.0
        %851 = vmatprep.subr.mxu0 0.0
        %852 = vmatpush1.msra.mxu0 0.0
        %853 = vmatprep.subr.mxu0 0.0
        %854 = vmatpush1.msra.mxu0 0.0
        %855 = vmatprep.subr.mxu0 0.0
        %856 = vmatpush1.msra.mxu0 0.0
        %857 = vmatprep.subr.mxu0 0.0
        %858 = vmatpush1.msra.mxu0 0.0
        %859 = vmatprep.mubr.f32.mxu0 0.0
        %v860 = vand.u32 %v260, 4294901760
        %861 = vmatmul.mubr.f32.gmra.mrb[0].mxu0 %v860
        %v862 = vpop.f32.mrb[0].mxu0
        %v863 = vadd.f32 %v768, %v862
        %v864 = vpop.f32.mrb[0].mxu0
        %v865 = vadd.f32 %v770, %v864
        %866 = vmatprep.mubr.f32.mxu0 0.0
        %v867 = vand.u32 %v263, 4294901760
        %868 = vmatmul.mubr.f32.gmra.mrb[0].mxu0 %v867
        %v869 = vpop.f32.mrb[0].mxu0
        %v870 = vadd.f32 %v775, %v869
        %v871 = vpop.f32.mrb[0].mxu0
        %v872 = vadd.f32 %v777, %v871
        %873 = vmatprep.mubr.f32.mxu0 0.0
        %v874 = vand.u32 %v266, 4294901760
        %875 = vmatmul.mubr.f32.gmra.mrb[0].mxu0 %v874
        %v876 = vpop.f32.mrb[0].mxu0
        %v877 = vadd.f32 %v782, %v876
        %v878 = vpop.f32.mrb[0].mxu0
        %v879 = vadd.f32 %v784, %v878
        %880 = vmatprep.mubr.f32.mxu0 0.0
        %v881 = vand.u32 %v269, 4294901760
        %882 = vmatmul.mubr.f32.gmra.mrb[0].mxu0 %v881
        %v883 = vpop.f32.mrb[0].mxu0
        %v884 = vadd.f32 %v789, %v883
        %v885 = vpop.f32.mrb[0].mxu0
        %v886 = vadd.f32 %v791, %v885
        %887 = vdwg.mxu0
        %888 = vst [vmem:[%s206] sm:$0xff] %v863
        %889 = vst [vmem:[%s206 + $0x8] sm:$0xff] %v865
        %890 = vst [vmem:[%s206 + $0x10] sm:$0xff] %v870
        %891 = vst [vmem:[%s206 + $0x18] sm:$0xff] %v872
        %892 = vst [vmem:[%s206 + $0x20] sm:$0xff] %v877
        %893 = vst [vmem:[%s206 + $0x28] sm:$0xff] %v879
        %894 = vst [vmem:[%s206 + $0x30] sm:$0xff] %v884
        %895 = vst [vmem:[%s206 + $0x38] sm:$0xff] %v886
        %s896 = sand.u32 %s114, 1
        %s897 = sand.u32 %s114, 1
        %s898 = smul.addr %s897, 64
        %s899 = scalar_lea.vmem [#allocation2], %s898
        // Predicated region
        $region33: #{a_call__.1} parent=31 // pred_check
          %p900 = pneg %p124
        $region34: #{a_call__.1} parent=31 // pred_check_branch
          %902 = sbr.rel (%p900) target = $region36
        $region35: #{a_call__.1} parent=31 // pred_region
          %s903 = smul.u32 4, %s18
          %s904 = smul.u32 2, %s19
          %s905 = smul.addr %s903, 4
          %s906 = sadd.s32 %s904, %s905
          %s907 = smul.addr %s906, 8
          %s908 = scalar_lea.vmem %s3, %s907
          // Predicated region
          $region37: #{a_call__.1} parent=35 // pred_check
            _
          $region38: #{a_call__.1} parent=35 // pred_check_branch
            %910 = sbr.rel (0) target = $region40
          $region39: #{a_call__.1} parent=35 // pred_region
            // Predicated region
            $region41: #{a_call__.1} parent=39 // pred_check
              _
            $region42: #{a_call__.1} parent=39 // pred_check_branch
              %912 = sbr.rel (0) target = $region44
            $region43: #{a_call__.1} parent=39 // pred_region
              loop: start=0, step=1, limit=1
              $region45: #{a_call__.1} parent=43 // loop_pre_header
                _
              $region46: #{a_call__.1} parent=43 // loop_header
                %s914 = sphi 0, %s918
                %p915 = scmp.ge.s32.totalorder %s914, 1
                %s919 = sphi %s899, %s899
                %s920 = sphi %s908, %s908
              $region47: #{a_call__.1} parent=43 // loop_header_branch
                %917 = sbr.rel (%p915) target = $region51
              $region48: #{a_call__.1} parent=43 // loop_body
                %v921 = vld [vmem:[%s919] sm:$0xff]
                %922 = vst [vmem:[%s920] sm:$0xff] %v921
                %v923 = vld [vmem:[%s919 + $0x8] sm:$0xff]
                %924 = vst [vmem:[%s920 + $0x8] sm:$0xff] %v923
                %v925 = vld [vmem:[%s919 + $0x10] sm:$0xff]
                %926 = vst [vmem:[%s920 + $0x20] sm:$0xff] %v925
                %v927 = vld [vmem:[%s919 + $0x18] sm:$0xff]
                %928 = vst [vmem:[%s920 + $0x28] sm:$0xff] %v927
                %v929 = vld [vmem:[%s919 + $0x20] sm:$0xff]
                %930 = vst [vmem:[%s920 + $0x40] sm:$0xff] %v929
                %v931 = vld [vmem:[%s919 + $0x28] sm:$0xff]
                %932 = vst [vmem:[%s920 + $0x48] sm:$0xff] %v931
                %v933 = vld [vmem:[%s919 + $0x30] sm:$0xff]
                %934 = vst [vmem:[%s920 + $0x60] sm:$0xff] %v933
                %v935 = vld [vmem:[%s919 + $0x38] sm:$0xff]
                %936 = vst [vmem:[%s920 + $0x68] sm:$0xff] %v935
              $region49: #{a_call__.1} parent=43 // loop_footer
                %s918 = sadd.s32 1, %s914
              $region50: #{a_call__.1} parent=43 // loop_footer_branch
                %913 = sbr.rel target = $region46
              $region51: #{a_call__.1} parent=43 // loop_exit
                _
            $region44: #{a_call__.1} parent=39 // pred_fallthru
              _
            // Predicated region
            $region52: #{a_call__.1} parent=39 // pred_check
              _
            $region53: #{a_call__.1} parent=39 // pred_check_branch
              %938 = sbr.rel target = $region55
            $region54: #{a_call__.1} parent=39 // pred_region
              _
            $region55: #{a_call__.1} parent=39 // pred_fallthru
              _
          $region40: #{a_call__.1} parent=35 // pred_fallthru
            _
          %939 = vnop
        $region36: #{a_call__.1} parent=31 // pred_fallthru
          _
      $region32: #{a_call__.1} parent=5 // pred_fallthru
        _
      %p940 = scmp.le.s32.totalorder 2, %s9
      // Predicated region
      $region56: #{a_call__.1} parent=5 // pred_check
        %p941 = pneg %p940
      $region57: #{a_call__.1} parent=5 // pred_check_branch
        %943 = sbr.rel (%p941) target = $region59
      $region58: #{a_call__.1} parent=5 // pred_region
        %s944 = ssub.s32 %s9, 2
        // Predicated region
        $region60: #{a_call__.1} parent=58 // pred_check
          %p945 = pneg %p130
        $region61: #{a_call__.1} parent=58 // pred_check_branch
          %947 = sbr.rel (%p945) target = $region63
        $region62: #{a_call__.1} parent=58 // pred_region
          %s948 = sand.u32 %s115, 1
          %s949 = sand.u32 %s115, 1
          %s950 = smul.addr %s949, 64
          %s951 = scalar_lea.vmem [#allocation2], %s950
        $region63: #{a_call__.1} parent=58 // pred_fallthru
          _
      $region59: #{a_call__.1} parent=5 // pred_fallthru
        _
    $region6: #{a_call__.1} parent=1 // loop_footer
      %s13 = sadd.s32 1, %s9
    $region7: #{a_call__.1} parent=1 // loop_footer_branch
      %8 = sbr.rel target = $region3
    $region8: #{a_call__.1} parent=1 // loop_exit
      _

</llo_original>
